<compile_context>
chip_gen: v5e
topology: v5e:2x2
jax: 0.10.0
libtpu: 0.0.40
codegen_flags: <defaults>
</compile_context>

<pallas_src>
import functools
import math

import jax
import jax.numpy as jnp
from jax import lax
from jax.experimental import pallas as pl
from jax.experimental.pallas import tpu as pltpu


_NEG_INF = -1e30          # finite "minus infinity" for the running max
_HEAD_UNROLL_MAX = 8      # static unroll below this, lax.fori_loop above


# --------------------------- small math helpers ------------------------------
def _layer_norm(x, gamma, beta, eps=1e-5):
    mean = jnp.mean(x, axis=-1, keepdims=True)
    var = jnp.mean((x - mean) ** 2, axis=-1, keepdims=True)
    return (x - mean) * lax.rsqrt(var + eps) * gamma + beta


def _erf(x):
    # Abramowitz & Stegun 7.1.26 polynomial erf (max abs err ~1.5e-7).  Uses
    # only exp/mul/add/select, which all have guaranteed Mosaic lowerings;
    # numerically indistinguishable from exact erf at f32/bf16 precision.
    a1, a2, a3, a4, a5 = (0.254829592, -0.284496736, 1.421413741,
                          -1.453152027, 1.061405429)
    p = 0.3275911
    ax = jnp.abs(x)
    t = 1.0 / (1.0 + p * ax)
    poly = t * (a1 + t * (a2 + t * (a3 + t * (a4 + t * a5))))
    y = 1.0 - poly * jnp.exp(-(ax * ax))
    return jnp.where(x >= 0, y, -y)


def _gelu(x):
    # exact (erf-based) GELU, matching torch.nn.functional.gelu default
    return 0.5 * x * (1.0 + _erf(x * (1.0 / math.sqrt(2.0))))


def _gelu_ref(x):
    return 0.5 * x * (1.0 + lax.erf(x * (1.0 / math.sqrt(2.0))))


def _for_each_head(n_head, body):
    """Static unroll for small head counts; bounded live ranges via fori_loop
    (unroll=2) once n_head is large enough that unrolling would spill."""
    if n_head < _HEAD_UNROLL_MAX:
        for h in range(n_head):
            body(h)
    else:
        def _wrapped(h, carry):
            body(h)
            return carry
        lax.fori_loop(0, n_head, _wrapped, 0, unroll=2)


# -------------------------------- kernels ------------------------------------
def qkv_proj_kernel(x_ref, wq_ref, bq_ref, wk_ref, bk_ref, wv_ref, bv_ref,
                    q_ref, k_ref, v_ref, *, n_head, d_key, d_value,
                    compute_dtype):
    """Project Q/K/V once per layer with full-width matmuls, store head-major."""
    x = x_ref[0].astype(compute_dtype)                                # [TM, D]
    qf = (jnp.dot(x, wq_ref[...], preferred_element_type=jnp.float32)
          + bq_ref[...]).astype(compute_dtype)                        # [TM, N*dk]
    kf = (jnp.dot(x, wk_ref[...], preferred_element_type=jnp.float32)
          + bk_ref[...]).astype(compute_dtype)
    vf = (jnp.dot(x, wv_ref[...], preferred_element_type=jnp.float32)
          + bv_ref[...]).astype(compute_dtype)
    # split heads into [N, TM, dh] slabs (runs once per (b, m-tile): cheap)
    for h in range(n_head):
        q_ref[0, h] = qf[:, h * d_key:(h + 1) * d_key]
        k_ref[0, h] = kf[:, h * d_key:(h + 1) * d_key]
        v_ref[0, h] = vf[:, h * d_value:(h + 1) * d_value]


def attention_kernel(x_ref, q_ref, k_ref, v_ref, bias_ref,
                     wo_ref, bo_ref, ln1g_ref, ln1b_ref,
                     out_ref,
                     m_scr, l_scr, acc_scr, proj_scr,
                     *, n_head, compute_dtype):
    """Flash attention over kv tiles + fused out-proj + residual + LayerNorm1."""
    ki = pl.program_id(2)
    nk = pl.num_programs(2)

    @pl.when(ki == 0)
    def _init():
        m_scr[...] = jnp.full(m_scr.shape, _NEG_INF, m_scr.dtype)
        l_scr[...] = jnp.zeros(l_scr.shape, l_scr.dtype)
        acc_scr[...] = jnp.zeros(acc_scr.shape, acc_scr.dtype)

    def _flash_step(h):
        qh = q_ref[0, h]                                              # [TM, dk]
        kh = k_ref[0, h]                                              # [TK, dk]
        vh = v_ref[0, h]                                              # [TK, dv]
        # scores = q_h @ k_h^T (contract on the head dim, no explicit transpose)
        s = lax.dot_general(qh, kh, (((1,), (1,)), ((), ())),
                            preferred_element_type=jnp.float32)       # [TM, TK]
        s = s + bias_ref[0, h].astype(jnp.float32)
        m_prev = m_scr[h]                                             # [TM, 1]
        m_new = jnp.maximum(m_prev, jnp.max(s, axis=-1, keepdims=True))
        alpha = jnp.exp(m_prev - m_new)
        p = jnp.exp(s - m_new)
        l_scr[h] = alpha * l_scr[h] + jnp.sum(p, axis=-1, keepdims=True)
        acc_scr[h] = alpha * acc_scr[h] + jnp.dot(
            p.astype(compute_dtype), vh, preferred_element_type=jnp.float32)
        m_scr[h] = m_new

    _for_each_head(n_head, _flash_step)

    @pl.when(ki == nk - 1)
    def _finalize():
        exact = jnp.dtype(compute_dtype) == jnp.dtype(jnp.float32)
        # Output projection accumulated in VMEM scratch (not a vreg-resident
        # [TM, D] value across the head loop).
        proj_scr[...] = jnp.zeros(proj_scr.shape, proj_scr.dtype)

        def _proj_head(h):
            l = jnp.maximum(l_scr[h], 1e-20)      # guard fully-masked rows
            if exact:
                ctx = acc_scr[h] / l              # exact in the f32 path
            else:
                ctx = acc_scr[h] * pl.reciprocal(l, approx=True)
            proj_scr[...] += jnp.dot(ctx.astype(compute_dtype), wo_ref[h],
                                     preferred_element_type=jnp.float32)

        _for_each_head(n_head, _proj_head)

        # residual is loaded only after the head loop (vreg pressure)
        x_res = x_ref[0].astype(jnp.float32)                          # [TM, D]
        attn = _layer_norm(proj_scr[...] + bo_ref[...] + x_res,
                           ln1g_ref[...], ln1b_ref[...])
        out_ref[0] = attn.astype(out_ref.dtype)


def ffn_kernel(x_ref, w1_ref, b1_ref, w2_ref, b2_ref, ln2g_ref, ln2b_ref,
               out_ref, acc_scr, *, compute_dtype):
    """Position-wise FFN tiled over d_ff + residual + LayerNorm2."""
    fi = pl.program_id(2)
    nf = pl.num_programs(2)

    @pl.when(fi == 0)
    def _init():
        acc_scr[...] = jnp.zeros(acc_scr.shape, acc_scr.dtype)

    x = x_ref[0].astype(compute_dtype)                                # [TM, D]
    h1 = _gelu(jnp.dot(x, w1_ref[...], preferred_element_type=jnp.float32)
               + b1_ref[...])                                         # [TM, TF]
    acc_scr[...] += jnp.dot(h1.astype(compute_dtype), w2_ref[...],
                            preferred_element_type=jnp.float32)       # [TM, D]

    @pl.when(fi == nf - 1)
    def _finalize():
        x_res = x_ref[0].astype(jnp.float32)
        out = _layer_norm(acc_scr[...] + b2_ref[...] + x_res,
                          ln2g_ref[...], ln2b_ref[...])
        out_ref[0] = out.astype(out_ref.dtype)


# --------------------------- host-side helpers --------------------------------
@functools.lru_cache(maxsize=None)
def _device_kind():
    try:
        return jax.devices()[0].device_kind.lower()
    except Exception:
        return ""


def _default_tile_k():
    kind = _device_kind()
    # v4/v5e have a 128-wide MXU (TK=128 fills the output columns already);
    # v6e/v7x have 256-wide MXUs, so a 256-wide KV tile is preferred.
    if "v4" in kind or "v5" in kind:
        return 128
    return 256


@functools.lru_cache(maxsize=None)
def _vmem_limit_bytes():
    # Generation-aware scoped-VMEM limit (v7x only has 64 MiB per TensorCore).
    try:
        cap = int(pltpu.get_tpu_info().vmem_capacity_bytes)
        return int(min(cap * 3 // 4, 100 * 1024 * 1024))
    except Exception:
        return None


def _compiler_params(dimension_semantics):
    return pltpu.CompilerParams(dimension_semantics=dimension_semantics,
                                vmem_limit_bytes=_vmem_limit_bytes())


def _full_spec(arr):
    nd = arr.ndim
    return pl.BlockSpec(arr.shape, lambda *_, _nd=nd: (0,) * _nd)


def _prep_layer_weights(params, *, n_head, d_key, d_value, compute_dtype):
    """Host-side (free) reshapes / dtype casts; 1/sqrt(d_key) folded into W_Q."""
    D = params["wq"].shape[0]
    N = n_head
    scale = d_key ** (-0.5)
    f32 = jnp.float32
    cd = compute_dtype
    return dict(
        wq=(params["wq"] * scale).astype(cd),               # [D, N*dk]
        bq=(params["bq"] * scale).astype(f32),               # [1, N*dk]
        wk=params["wk"].astype(cd), bk=params["bk"].astype(f32),
        wv=params["wv"].astype(cd), bv=params["bv"].astype(f32),
        wo=params["wo"].reshape(N, d_value, D).astype(cd),   # [N, dv, D]
        bo=params["bo"].astype(f32),
        ln1g=params["ln1g"].astype(f32), ln1b=params["ln1b"].astype(f32),
        w1=params["w1"].astype(cd), b1=params["b1"].astype(f32),
        w2=params["w2"].astype(cd), b2=params["b2"].astype(f32),
        ln2g=params["ln2g"].astype(f32), ln2b=params["ln2b"].astype(f32),
    )


def _qkv_projection(x, w, *, n_head, d_key, d_value, compute_dtype, tile_m):
    B, M, D = x.shape
    N = n_head
    tm = M if M < tile_m else tile_m
    assert M % tm == 0, "seq length must divide the tile size"
    n_m = M // tm

    kernel = functools.partial(qkv_proj_kernel, n_head=n_head, d_key=d_key,
                               d_value=d_value, compute_dtype=compute_dtype)
    weights = (w["wq"], w["bq"], w["wk"], w["bk"], w["wv"], w["bv"])
    return pl.pallas_call(
        kernel,
        grid=(B, n_m),
        in_specs=[pl.BlockSpec((1, tm, D), lambda b, i: (b, i, 0))]
                 + [_full_spec(a) for a in weights],
        out_specs=[
            pl.BlockSpec((1, N, tm, d_key), lambda b, i: (b, 0, i, 0)),
            pl.BlockSpec((1, N, tm, d_key), lambda b, i: (b, 0, i, 0)),
            pl.BlockSpec((1, N, tm, d_value), lambda b, i: (b, 0, i, 0)),
        ],
        out_shape=[
            jax.ShapeDtypeStruct((B, N, M, d_key), compute_dtype),
            jax.ShapeDtypeStruct((B, N, M, d_key), compute_dtype),
            jax.ShapeDtypeStruct((B, N, M, d_value), compute_dtype),
        ],
        compiler_params=_compiler_params(("parallel", "parallel")),
    )(x, *weights)


def _attention(x, q, k, v, bias, w, *, n_head, compute_dtype, tile_m, tile_k):
    B, M, D = x.shape
    N = n_head
    d_key = q.shape[-1]
    d_value = v.shape[-1]
    tm = M if M < tile_m else tile_m
    tk = M if M < tile_k else tile_k
    assert M % tm == 0 and M % tk == 0, "seq length must divide the tile sizes"
    n_q, n_kv = M // tm, M // tk

    kernel = functools.partial(attention_kernel, n_head=n_head,
                               compute_dtype=compute_dtype)
    return pl.pallas_call(
        kernel,
        grid=(B, n_q, n_kv),
        in_specs=[
            pl.BlockSpec((1, tm, D), lambda b, qi, ki: (b, qi, 0)),          # residual
            pl.BlockSpec((1, N, tm, d_key), lambda b, qi, ki: (b, 0, qi, 0)),   # Q
            pl.BlockSpec((1, N, tk, d_key), lambda b, qi, ki: (b, 0, ki, 0)),   # K
            pl.BlockSpec((1, N, tk, d_value), lambda b, qi, ki: (b, 0, ki, 0)), # V
            pl.BlockSpec((1, N, tm, tk), lambda b, qi, ki: (b, 0, qi, ki)),     # bias
            _full_spec(w["wo"]), _full_spec(w["bo"]),
            _full_spec(w["ln1g"]), _full_spec(w["ln1b"]),
        ],
        out_specs=pl.BlockSpec((1, tm, D), lambda b, qi, ki: (b, qi, 0)),
        out_shape=jax.ShapeDtypeStruct((B, M, D), x.dtype),
        scratch_shapes=[
            pltpu.VMEM((N, tm, 1), jnp.float32),        # running max
            pltpu.VMEM((N, tm, 1), jnp.float32),        # running denominator
            pltpu.VMEM((N, tm, d_value), jnp.float32),  # running PV accumulator
            pltpu.VMEM((tm, D), jnp.float32),           # output-proj accumulator
        ],
        compiler_params=_compiler_params(("parallel", "parallel", "arbitrary")),
    )(x, q, k, v, bias, w["wo"], w["bo"], w["ln1g"], w["ln1b"])


def _ffn(x, w, *, compute_dtype, tile_m, tile_ff):
    B, M, D = x.shape
    d_ff = w["w1"].shape[1]
    tm = M if M < tile_m else tile_m
    tf = d_ff if d_ff < tile_ff else tile_ff
    assert M % tm == 0 and d_ff % tf == 0
    n_m, n_f = M // tm, d_ff // tf

    kernel = functools.partial(ffn_kernel, compute_dtype=compute_dtype)
    return pl.pallas_call(
        kernel,
        grid=(B, n_m, n_f),
        in_specs=[
            pl.BlockSpec((1, tm, D), lambda b, i, f: (b, i, 0)),
            pl.BlockSpec((D, tf), lambda b, i, f: (0, f)),     # w1 column tile
            pl.BlockSpec((1, tf), lambda b, i, f: (0, f)),     # b1 tile
            pl.BlockSpec((tf, D), lambda b, i, f: (f, 0)),     # w2 row tile
            _full_spec(w["b2"]), _full_spec(w["ln2g"]), _full_spec(w["ln2b"]),
        ],
        out_specs=pl.BlockSpec((1, tm, D), lambda b, i, f: (b, i, 0)),
        out_shape=jax.ShapeDtypeStruct((B, M, D), x.dtype),
        scratch_shapes=[pltpu.VMEM((tm, D), jnp.float32)],
        compiler_params=_compiler_params(("parallel", "parallel", "arbitrary")),
    )(x, w["w1"], w["b1"], w["w2"], w["b2"], w["ln2g"], w["ln2b"])


def encoder_layer_forward(x, attn_bias, params, *, n_head, d_key, d_value,
                          compute_dtype=jnp.bfloat16, tile_m=128,
                          tile_k=None, tile_ff=512):
    if tile_k is None:
        tile_k = _default_tile_k()
    w = _prep_layer_weights(params, n_head=n_head, d_key=d_key,
                            d_value=d_value, compute_dtype=compute_dtype)
    # 1) Q/K/V projected once per layer (hoisted out of the flash kv loop).
    q, k, v = _qkv_projection(x, w, n_head=n_head, d_key=d_key,
                              d_value=d_value, compute_dtype=compute_dtype,
                              tile_m=tile_m)
    # 2) flash attention + fused output projection + residual + LayerNorm1.
    attn_out = _attention(x, q, k, v, attn_bias, w, n_head=n_head,
                          compute_dtype=compute_dtype,
                          tile_m=tile_m, tile_k=tile_k)
    # 3) FFN (tiled over d_ff, separate call so w1/w2 are never resident
    #    during the attention sweep) + residual + LayerNorm2.
    return _ffn(attn_out, w, compute_dtype=compute_dtype,
                tile_m=tile_m, tile_ff=tile_ff)


def encoder_forward(x, attn_bias, layer_params, *, n_head, d_key, d_value,
                    compute_dtype=jnp.bfloat16, tile_m=128, tile_k=None,
                    tile_ff=512):
    """Stack of identical encoder layers (the `encoder.forward` loop)."""
    # The B*N*M*M bias is the dominant HBM stream; cast it once to the compute
    # dtype (bf16 halves bias bandwidth; the f32 path keeps it exact).
    bias_c = attn_bias.astype(compute_dtype)
    for params in layer_params:
        x = encoder_layer_forward(x, bias_c, params, n_head=n_head,
                                  d_key=d_key, d_value=d_value,
                                  compute_dtype=compute_dtype, tile_m=tile_m,
                                  tile_k=tile_k, tile_ff=tile_ff)
    return x


# ------------------------- pure-JAX reference --------------------------------
def _ref_layer(x, bias, p, n_head, d_key, d_value):
    B, M, D = x.shape
    q = x @ p["wq"] + p["bq"]
    k = x @ p["wk"] + p["bk"]
    v = x @ p["wv"] + p["bv"]
    q = q.reshape(B, M, n_head, d_key).transpose(0, 2, 1, 3)
    k = k.reshape(B, M, n_head, d_key).transpose(0, 2, 1, 3)
    v = v.reshape(B, M, n_head, d_value).transpose(0, 2, 1, 3)
    scores = jnp.einsum("bnmd,bnkd->bnmk", q * d_key ** (-0.5), k) + bias
    w = jax.nn.softmax(scores, axis=-1)
    ctx = jnp.einsum("bnmk,bnkd->bnmd", w, v)
    ctx = ctx.transpose(0, 2, 1, 3).reshape(B, M, n_head * d_value)
    proj = ctx @ p["wo"] + p["bo"]
    attn_out = _layer_norm(proj + x, p["ln1g"], p["ln1b"])
    h1 = _gelu_ref(attn_out @ p["w1"] + p["b1"])
    h2 = h1 @ p["w2"] + p["b2"]
    return _layer_norm(h2 + attn_out, p["ln2g"], p["ln2b"])


def _ref_encoder(x, bias, layer_params, n_head, d_key, d_value):
    for p in layer_params:
        x = _ref_layer(x, bias, p, n_head, d_key, d_value)
    return x


# ------------------------- parameter construction ----------------------------
def make_layer_params(key, d_model, d_key, d_value, n_head, d_ff):
    ks = jax.random.split(key, 12)
    s = 0.05
    f32 = jnp.float32
    return {
        "wq": jax.random.normal(ks[0], (d_model, n_head * d_key), f32) * s,
        "bq": jax.random.normal(ks[1], (1, n_head * d_key), f32) * s,
        "wk": jax.random.normal(ks[2], (d_model, n_head * d_key), f32) * s,
        "bk": jax.random.normal(ks[3], (1, n_head * d_key), f32) * s,
        "wv": jax.random.normal(ks[4], (d_model, n_head * d_value), f32) * s,
        "bv": jax.random.normal(ks[5], (1, n_head * d_value), f32) * s,
        "wo": jax.random.normal(ks[6], (n_head * d_value, d_model), f32) * s,
        "bo": jax.random.normal(ks[7], (1, d_model), f32) * s,
        "ln1g": jnp.ones((1, d_model), f32),
        "ln1b": jnp.zeros((1, d_model), f32),
        "w1": jax.random.normal(ks[8], (d_model, d_ff), f32) * s,
        "b1": jax.random.normal(ks[9], (1, d_ff), f32) * s,
        "w2": jax.random.normal(ks[10], (d_ff, d_model), f32) * s,
        "b2": jax.random.normal(ks[11], (1, d_model), f32) * s,
        "ln2g": jnp.ones((1, d_model), f32),
        "ln2b": jnp.zeros((1, d_model), f32),
    }


def _run_config(name, *, B, M, n_layer, n_head, d_key, d_value, d_model, d_ff,
                compute_dtype, rtol, atol, seed=0):
    root = jax.random.PRNGKey(seed)
    k_x, k_b, k_p = jax.random.split(root, 3)
    x = jax.random.normal(k_x, (B, M, d_model), jnp.float32)
    bias = jax.random.normal(k_b, (B, n_head, M, M), jnp.float32) * 0.1
    layer_keys = jax.random.split(k_p, n_layer)
    layer_params = [make_layer_params(layer_keys[i], d_model, d_key,
                                      d_value, n_head, d_ff)
                    for i in range(n_layer)]

    out = encoder_forward(x, bias, layer_params, n_head=n_head,
                          d_key=d_key, d_value=d_value,
                          compute_dtype=compute_dtype)
    out = jax.block_until_ready(out)

    ref = _ref_encoder(x, bias, layer_params, n_head, d_key, d_value)
    assert out.shape == (B, M, d_model)
    max_err = float(jnp.max(jnp.abs(out - ref)))
    assert jnp.allclose(out, ref, rtol=rtol, atol=atol), (
        f"{name}: mismatch vs pure-JAX reference (max abs err {max_err:.2e})")


if __name__ == "__main__":
    # Small, module-consistent shapes (primary check) — f32 and bf16 compute.
    _run_config("small-f32", B=2, M=8, n_layer=2, n_head=2,
                d_key=16, d_value=16, d_model=32, d_ff=64,
                compute_dtype=jnp.float32, rtol=1e-2, atol=1e-2)
    _run_config("small-bf16", B=2, M=8, n_layer=2, n_head=2,
                d_key=16, d_value=16, d_model=32, d_ff=64,
                compute_dtype=jnp.bfloat16, rtol=5e-2, atol=5e-2)
    # 128-aligned config exercising the multi-tile flash KV loop, q-tiling,
    # the d_ff-tiled FFN accumulator and the parallel (megacore) grid axes.
    _run_config("tiled-bf16", B=2, M=512, n_layer=1, n_head=2,
                d_key=64, d_value=64, d_model=128, d_ff=1024,
                compute_dtype=jnp.bfloat16, rtol=5e-2, atol=5e-2)

    print("KERNEL_OK")
</pallas_src>

<mosaic_0001>
module attributes {stable_mosaic.version = 11 : i64} {
  func.func @qkv_proj_kernel(%arg0: i32, %arg1: i32, %arg2: memref<1x8x32xf32, #tpu.memory_space<vmem>>, %arg3: memref<32x32xf32, #tpu.memory_space<vmem>>, %arg4: memref<1x32xf32, #tpu.memory_space<vmem>>, %arg5: memref<32x32xf32, #tpu.memory_space<vmem>>, %arg6: memref<1x32xf32, #tpu.memory_space<vmem>>, %arg7: memref<32x32xf32, #tpu.memory_space<vmem>>, %arg8: memref<1x32xf32, #tpu.memory_space<vmem>>, %arg9: memref<1x2x8x16xf32, #tpu.memory_space<vmem>>, %arg10: memref<1x2x8x16xf32, #tpu.memory_space<vmem>>, %arg11: memref<1x2x8x16xf32, #tpu.memory_space<vmem>>) attributes {dimension_semantics = [#tpu.dimension_semantics<parallel>, #tpu.dimension_semantics<parallel>], iteration_bounds = array<i64: 2, 1>, scalar_prefetch = 0 : i64, scratch_operands = 0 : i64, tpu.core_type = #tpu.core_type<tc>, window_params = [{transform_indices = @transform_0, window_bounds = array<i64: 1, 8, 32>}, {pipeline_mode = #tpu.pipeline_mode<synchronous>, transform_indices = @transform_1, window_bounds = array<i64: 32, 32>}, {pipeline_mode = #tpu.pipeline_mode<synchronous>, transform_indices = @transform_2, window_bounds = array<i64: 1, 32>}, {pipeline_mode = #tpu.pipeline_mode<synchronous>, transform_indices = @transform_3, window_bounds = array<i64: 32, 32>}, {pipeline_mode = #tpu.pipeline_mode<synchronous>, transform_indices = @transform_4, window_bounds = array<i64: 1, 32>}, {pipeline_mode = #tpu.pipeline_mode<synchronous>, transform_indices = @transform_5, window_bounds = array<i64: 32, 32>}, {pipeline_mode = #tpu.pipeline_mode<synchronous>, transform_indices = @transform_6, window_bounds = array<i64: 1, 32>}, {transform_indices = @transform_7, window_bounds = array<i64: 1, 2, 8, 16>}, {transform_indices = @transform_8, window_bounds = array<i64: 1, 2, 8, 16>}, {transform_indices = @transform_9, window_bounds = array<i64: 1, 2, 8, 16>}]} {
    %c0 = arith.constant 0 : index
    %c0_0 = arith.constant 0 : index
    %c0_1 = arith.constant 0 : index
    %0 = vector.load %arg2[%c0, %c0_0, %c0_1] : memref<1x8x32xf32, #tpu.memory_space<vmem>>, vector<1x8x32xf32>
    %1 = vector.shape_cast %0 : vector<1x8x32xf32> to vector<8x32xf32>
    %c0_2 = arith.constant 0 : index
    %c0_3 = arith.constant 0 : index
    %2 = vector.load %arg3[%c0_2, %c0_3] : memref<32x32xf32, #tpu.memory_space<vmem>>, vector<32x32xf32>
    %cst = arith.constant dense<0.000000e+00> : vector<8x32xf32>
    %3 = tpu.matmul %1, %2, %cst {dimension_numbers = #tpu.dot_dimension_numbers<[1], [0], [0], [1], [0, 0, 1, 1], [], []>} : vector<8x32xf32>, vector<32x32xf32>, vector<8x32xf32> -> vector<8x32xf32>
    %c0_4 = arith.constant 0 : index
    %c0_5 = arith.constant 0 : index
    %4 = vector.load %arg4[%c0_4, %c0_5] : memref<1x32xf32, #tpu.memory_space<vmem>>, vector<1x32xf32>
    %5 = vector.broadcast %4 : vector<1x32xf32> to vector<8x32xf32>
    %6 = arith.addf %3, %5 : vector<8x32xf32>
    %c0_6 = arith.constant 0 : index
    %c0_7 = arith.constant 0 : index
    %7 = vector.load %arg5[%c0_6, %c0_7] : memref<32x32xf32, #tpu.memory_space<vmem>>, vector<32x32xf32>
    %cst_8 = arith.constant dense<0.000000e+00> : vector<8x32xf32>
    %8 = tpu.matmul %1, %7, %cst_8 {dimension_numbers = #tpu.dot_dimension_numbers<[1], [0], [0], [1], [0, 0, 1, 1], [], []>} : vector<8x32xf32>, vector<32x32xf32>, vector<8x32xf32> -> vector<8x32xf32>
    %c0_9 = arith.constant 0 : index
    %c0_10 = arith.constant 0 : index
    %9 = vector.load %arg6[%c0_9, %c0_10] : memref<1x32xf32, #tpu.memory_space<vmem>>, vector<1x32xf32>
    %10 = vector.broadcast %9 : vector<1x32xf32> to vector<8x32xf32>
    %11 = arith.addf %8, %10 : vector<8x32xf32>
    %c0_11 = arith.constant 0 : index
    %c0_12 = arith.constant 0 : index
    %12 = vector.load %arg7[%c0_11, %c0_12] : memref<32x32xf32, #tpu.memory_space<vmem>>, vector<32x32xf32>
    %cst_13 = arith.constant dense<0.000000e+00> : vector<8x32xf32>
    %13 = tpu.matmul %1, %12, %cst_13 {dimension_numbers = #tpu.dot_dimension_numbers<[1], [0], [0], [1], [0, 0, 1, 1], [], []>} : vector<8x32xf32>, vector<32x32xf32>, vector<8x32xf32> -> vector<8x32xf32>
    %c0_14 = arith.constant 0 : index
    %c0_15 = arith.constant 0 : index
    %14 = vector.load %arg8[%c0_14, %c0_15] : memref<1x32xf32, #tpu.memory_space<vmem>>, vector<1x32xf32>
    %15 = vector.broadcast %14 : vector<1x32xf32> to vector<8x32xf32>
    %16 = arith.addf %13, %15 : vector<8x32xf32>
    %17 = vector.extract_strided_slice %6 {offsets = [0, 0], sizes = [8, 16], strides = [1, 1]} : vector<8x32xf32> to vector<8x16xf32>
    %c0_16 = arith.constant 0 : index
    %c0_17 = arith.constant 0 : index
    %c0_18 = arith.constant 0 : index
    %c0_19 = arith.constant 0 : index
    %18 = vector.load %arg9[%c0_16, %c0_17, %c0_18, %c0_19] : memref<1x2x8x16xf32, #tpu.memory_space<vmem>>, vector<1x1x8x16xf32>
    %19 = vector.shape_cast %18 : vector<1x1x8x16xf32> to vector<8x16xf32>
    %20 = vector.shape_cast %17 : vector<8x16xf32> to vector<1x1x8x16xf32>
    tpu.vector_store %arg9[%c0_16, %c0_17, %c0_18, %c0_19], %20 {strides = array<i32>} : memref<1x2x8x16xf32, #tpu.memory_space<vmem>>, vector<1x1x8x16xf32>,
    %21 = vector.extract_strided_slice %11 {offsets = [0, 0], sizes = [8, 16], strides = [1, 1]} : vector<8x32xf32> to vector<8x16xf32>
    %c0_20 = arith.constant 0 : index
    %c0_21 = arith.constant 0 : index
    %c0_22 = arith.constant 0 : index
    %c0_23 = arith.constant 0 : index
    %22 = vector.load %arg10[%c0_20, %c0_21, %c0_22, %c0_23] : memref<1x2x8x16xf32, #tpu.memory_space<vmem>>, vector<1x1x8x16xf32>
    %23 = vector.shape_cast %22 : vector<1x1x8x16xf32> to vector<8x16xf32>
    %24 = vector.shape_cast %21 : vector<8x16xf32> to vector<1x1x8x16xf32>
    tpu.vector_store %arg10[%c0_20, %c0_21, %c0_22, %c0_23], %24 {strides = array<i32>} : memref<1x2x8x16xf32, #tpu.memory_space<vmem>>, vector<1x1x8x16xf32>,
    %25 = vector.extract_strided_slice %16 {offsets = [0, 0], sizes = [8, 16], strides = [1, 1]} : vector<8x32xf32> to vector<8x16xf32>
    %c0_24 = arith.constant 0 : index
    %c0_25 = arith.constant 0 : index
    %c0_26 = arith.constant 0 : index
    %c0_27 = arith.constant 0 : index
    %26 = vector.load %arg11[%c0_24, %c0_25, %c0_26, %c0_27] : memref<1x2x8x16xf32, #tpu.memory_space<vmem>>, vector<1x1x8x16xf32>
    %27 = vector.shape_cast %26 : vector<1x1x8x16xf32> to vector<8x16xf32>
    %28 = vector.shape_cast %25 : vector<8x16xf32> to vector<1x1x8x16xf32>
    tpu.vector_store %arg11[%c0_24, %c0_25, %c0_26, %c0_27], %28 {strides = array<i32>} : memref<1x2x8x16xf32, #tpu.memory_space<vmem>>, vector<1x1x8x16xf32>,
    %29 = vector.extract_strided_slice %6 {offsets = [0, 16], sizes = [8, 16], strides = [1, 1]} : vector<8x32xf32> to vector<8x16xf32>
    %c0_28 = arith.constant 0 : index
    %c1 = arith.constant 1 : index
    %c0_29 = arith.constant 0 : index
    %c0_30 = arith.constant 0 : index
    %30 = vector.load %arg9[%c0_28, %c1, %c0_29, %c0_30] : memref<1x2x8x16xf32, #tpu.memory_space<vmem>>, vector<1x1x8x16xf32>
    %31 = vector.shape_cast %30 : vector<1x1x8x16xf32> to vector<8x16xf32>
    %32 = vector.shape_cast %29 : vector<8x16xf32> to vector<1x1x8x16xf32>
    tpu.vector_store %arg9[%c0_28, %c1, %c0_29, %c0_30], %32 {strides = array<i32>} : memref<1x2x8x16xf32, #tpu.memory_space<vmem>>, vector<1x1x8x16xf32>,
    %33 = vector.extract_strided_slice %11 {offsets = [0, 16], sizes = [8, 16], strides = [1, 1]} : vector<8x32xf32> to vector<8x16xf32>
    %c0_31 = arith.constant 0 : index
    %c1_32 = arith.constant 1 : index
    %c0_33 = arith.constant 0 : index
    %c0_34 = arith.constant 0 : index
    %34 = vector.load %arg10[%c0_31, %c1_32, %c0_33, %c0_34] : memref<1x2x8x16xf32, #tpu.memory_space<vmem>>, vector<1x1x8x16xf32>
    %35 = vector.shape_cast %34 : vector<1x1x8x16xf32> to vector<8x16xf32>
    %36 = vector.shape_cast %33 : vector<8x16xf32> to vector<1x1x8x16xf32>
    tpu.vector_store %arg10[%c0_31, %c1_32, %c0_33, %c0_34], %36 {strides = array<i32>} : memref<1x2x8x16xf32, #tpu.memory_space<vmem>>, vector<1x1x8x16xf32>,
    %37 = vector.extract_strided_slice %16 {offsets = [0, 16], sizes = [8, 16], strides = [1, 1]} : vector<8x32xf32> to vector<8x16xf32>
    %c0_35 = arith.constant 0 : index
    %c1_36 = arith.constant 1 : index
    %c0_37 = arith.constant 0 : index
    %c0_38 = arith.constant 0 : index
    %38 = vector.load %arg11[%c0_35, %c1_36, %c0_37, %c0_38] : memref<1x2x8x16xf32, #tpu.memory_space<vmem>>, vector<1x1x8x16xf32>
    %39 = vector.shape_cast %38 : vector<1x1x8x16xf32> to vector<8x16xf32>
    %40 = vector.shape_cast %37 : vector<8x16xf32> to vector<1x1x8x16xf32>
    tpu.vector_store %arg11[%c0_35, %c1_36, %c0_37, %c0_38], %40 {strides = array<i32>} : memref<1x2x8x16xf32, #tpu.memory_space<vmem>>, vector<1x1x8x16xf32>,
    return
  }
  func.func @transform_0(%arg0: i32, %arg1: i32) -> (i32, i32, i32) {
    %c0_i32 = arith.constant 0 : i32
    %c0_i32_0 = arith.constant 0 : i32
    return %arg0, %arg1, %c0_i32 : i32, i32, i32
  }
  func.func @transform_1(%arg0: i32, %arg1: i32) -> (i32, i32) {
    %c0_i32 = arith.constant 0 : i32
    %c0_i32_0 = arith.constant 0 : i32
    %c0_i32_1 = arith.constant 0 : i32
    return %c0_i32, %c0_i32_0 : i32, i32
  }
  func.func @transform_2(%arg0: i32, %arg1: i32) -> (i32, i32) {
    %c0_i32 = arith.constant 0 : i32
    %c0_i32_0 = arith.constant 0 : i32
    %c0_i32_1 = arith.constant 0 : i32
    return %c0_i32, %c0_i32_0 : i32, i32
  }
  func.func @transform_3(%arg0: i32, %arg1: i32) -> (i32, i32) {
    %c0_i32 = arith.constant 0 : i32
    %c0_i32_0 = arith.constant 0 : i32
    %c0_i32_1 = arith.constant 0 : i32
    return %c0_i32, %c0_i32_0 : i32, i32
  }
  func.func @transform_4(%arg0: i32, %arg1: i32) -> (i32, i32) {
    %c0_i32 = arith.constant 0 : i32
    %c0_i32_0 = arith.constant 0 : i32
    %c0_i32_1 = arith.constant 0 : i32
    return %c0_i32, %c0_i32_0 : i32, i32
  }
  func.func @transform_5(%arg0: i32, %arg1: i32) -> (i32, i32) {
    %c0_i32 = arith.constant 0 : i32
    %c0_i32_0 = arith.constant 0 : i32
    %c0_i32_1 = arith.constant 0 : i32
    return %c0_i32, %c0_i32_0 : i32, i32
  }
  func.func @transform_6(%arg0: i32, %arg1: i32) -> (i32, i32) {
    %c0_i32 = arith.constant 0 : i32
    %c0_i32_0 = arith.constant 0 : i32
    %c0_i32_1 = arith.constant 0 : i32
    return %c0_i32, %c0_i32_0 : i32, i32
  }
  func.func @transform_7(%arg0: i32, %arg1: i32) -> (i32, i32, i32, i32) {
    %c0_i32 = arith.constant 0 : i32
    %c0_i32_0 = arith.constant 0 : i32
    %c0_i32_1 = arith.constant 0 : i32
    return %arg0, %c0_i32, %arg1, %c0_i32_0 : i32, i32, i32, i32
  }
  func.func @transform_8(%arg0: i32, %arg1: i32) -> (i32, i32, i32, i32) {
    %c0_i32 = arith.constant 0 : i32
    %c0_i32_0 = arith.constant 0 : i32
    %c0_i32_1 = arith.constant 0 : i32
    return %arg0, %c0_i32, %arg1, %c0_i32_0 : i32, i32, i32, i32
  }
  func.func @transform_9(%arg0: i32, %arg1: i32) -> (i32, i32, i32, i32) {
    %c0_i32 = arith.constant 0 : i32
    %c0_i32_0 = arith.constant 0 : i32
    %c0_i32_1 = arith.constant 0 : i32
    return %arg0, %c0_i32, %arg1, %c0_i32_0 : i32, i32, i32, i32
  }
}

</mosaic_0001>

<llo_original>
// kernel: tpu_custom_call.1
$region0: #{tpu_custom_call.1}
  #allocation0 [shape = 'u32[]', space=smem, size = 0x4, offset = 0x4, fixed_abs, tag = 'smem constant byte address 0x4 - core index']
  #allocation1 [shape = 'u32[72,128]{1,0:T(1,128)}', space=vmem, size = 0x9000, scoped, tag = 'internal scratch']
  %s0 = inlined_call_operand.hbm [shape: f32[2,8,32], index: 0, kind: input, shape index: {}]
  %s1 = inlined_call_operand.hbm [shape: f32[32,32], index: 1, kind: input, shape index: {}]
  %s2 = inlined_call_operand.vmem [shape: f32[1,32], index: 2, kind: input, shape index: {}]
  %s3 = inlined_call_operand.hbm [shape: f32[32,32], index: 3, kind: input, shape index: {}]
  %s4 = inlined_call_operand.vmem [shape: f32[1,32], index: 4, kind: input, shape index: {}]
  %s5 = inlined_call_operand.hbm [shape: f32[32,32], index: 5, kind: input, shape index: {}]
  %s6 = inlined_call_operand.vmem [shape: f32[1,32], index: 6, kind: input, shape index: {}]
  %s7 = inlined_call_operand.hbm [shape: f32[2,2,8,16], index: 7, kind: output, shape index: {0}]
  %s8 = inlined_call_operand.hbm [shape: f32[2,2,8,16], index: 8, kind: output, shape index: {1}]
  %s9 = inlined_call_operand.hbm [shape: f32[2,2,8,16], index: 9, kind: output, shape index: {2}]
  %10 = xla_tuple %s7, %s8, %s9
  %s11 = sld [smem:[#allocation0]]
  $region93: #{tpu_custom_call.1} parent=0
    _
  %s13 = ssub.s32 1, %s11
  %s14 = scalar_select 0, %s13, %s11
  $region1: #{tpu_custom_call.1} parent=0
    #allocation2 [shape = 'u8[8192]{0}', space=vmem, size = 0x2000, scoped, tag = 'input window, operand 0']
    #allocation3 [shape = 's32[2]{0}', space=sflag, size = 0x8, scoped, tag = 'scoped memory for tpu_custom_call.1']
    #allocation4 [shape = 's32[2]{0}', space=sflag, size = 0x8, scoped, tag = 'scoped memory for tpu_custom_call.1']
    #allocation5 [shape = 'u8[16384]{0}', space=vmem, size = 0x4000, scoped, tag = 'input window, operand 1, single buffered']
    #allocation6 [shape = 's32[1]{0}', space=sflag, size = 0x4, scoped, tag = 'scoped memory for tpu_custom_call.1']
    #allocation7 [shape = 'u8[16384]{0}', space=vmem, size = 0x4000, scoped, tag = 'input window, operand 3, single buffered']
    #allocation8 [shape = 'u8[16384]{0}', space=vmem, size = 0x4000, scoped, tag = 'input window, operand 5, single buffered']
    #allocation9 [shape = 's32[1]{0}', space=sflag, size = 0x4, scoped, tag = 'scoped memory for tpu_custom_call.1']
    #allocation10 [shape = 'u8[16384]{0}', space=vmem, size = 0x4000, scoped, tag = 'output window, operand 0']
    #allocation11 [shape = 'u8[16384]{0}', space=vmem, size = 0x4000, scoped, tag = 'output window, operand 1']
    #allocation12 [shape = 's32[2]{0}', space=sflag, size = 0x8, scoped, tag = 'scoped memory for tpu_custom_call.1']
    #allocation13 [shape = 'u8[16384]{0}', space=vmem, size = 0x4000, scoped, tag = 'output window, operand 2']
    %15 = vsyncpa [#allocation3], 0
    %s16 = scalar_lea.sflag [#allocation3], 1
    %17 = vsyncpa %s16, 0
    %18 = vsyncpa [#allocation6], 0
    %19 = vsyncpa [#allocation9], 0
    %20 = vsyncpa [#allocation4], 0
    %s21 = scalar_lea.sflag [#allocation4], 1
    %22 = vsyncpa %s21, 0
    %23 = vsyncpa [#allocation12], 0
    %s24 = scalar_lea.sflag [#allocation12], 1
    %25 = vsyncpa %s24, 0
    loop: start=0, step=1, limit=4
    $region2: #{tpu_custom_call.1} parent=1 // loop_pre_header
      _
    $region3: #{tpu_custom_call.1} parent=1 // loop_header
      %s27 = sphi 0, %s31
      %p28 = scmp.ge.s32.totalorder %s27, 4
      %s34 = sphi 0, %s46
      %s35 = sphi 0, %s42
      %s36 = sphi 0, %s34
      %s37 = sphi 0, %s35
      %s38 = sphi 0, %s36
      %s39 = sphi 0, %s37
      %s51 = sphi 0, %s53
      %s54 = sphi 0, %s51
      %s55 = sphi 0, %s54
      %s71 = sphi 0, %s55
      %s75 = sphi 0, %s75
      %s77 = sphi 0, %s75
      %s78 = sphi 0, %s77
      %s92 = sphi 0, %s78
      %s96 = sphi 0, %s96
      %s98 = sphi 0, %s96
      %s99 = sphi 0, %s98
      %s113 = sphi 0, %s99
      %s117 = sphi 0, %s117
      %s119 = sphi 0, %s117
      %s120 = sphi 0, %s119
      %s134 = sphi 0, %s120
      %s138 = sphi 0, %s138
      %s140 = sphi 0, %s138
      %s141 = sphi 0, %s140
      %s155 = sphi 0, %s141
      %s159 = sphi 0, %s159
      %s161 = sphi 0, %s159
      %s162 = sphi 0, %s161
      %s176 = sphi 0, %s162
      %s180 = sphi 0, %s180
      %s182 = sphi 0, %s180
      %s183 = sphi 0, %s182
      %s197 = sphi 0, %s183
      %s205 = sphi 0, %s207
      %s208 = sphi 0, %s205
      %s209 = sphi 0, %s208
      %s225 = sphi 0, %s209
      %s233 = sphi 0, %s235
      %s236 = sphi 0, %s233
      %s237 = sphi 0, %s236
      %s253 = sphi 0, %s237
      %s261 = sphi 0, %s263
      %s264 = sphi 0, %s261
      %s265 = sphi 0, %s264
      %s281 = sphi 0, %s265
    $region4: #{tpu_custom_call.1} parent=1 // loop_header_branch
      %30 = sbr.rel (%p28) target = $region8
    $region5: #{tpu_custom_call.1} parent=1 // loop_body
      %s32 = ssub.s32 %s27, 1
      %s33 = ssub.s32 %s27, 2
      %s40 = sadd.s32 1, %s35
      %p41 = scmp.ge.s32.totalorder %s40, 1
      %s42 = scalar_select %p41, 0, %s40
      %s43 = sadd.s32 1, %s34
      %s44 = scalar_select %p41, %s43, %s34
      %p45 = scmp.ge.s32.totalorder %s44, 2
      %s46 = scalar_select %p45, 0, %s44
      %s47 = ssub.s32 %s34, %s46
      %s48 = ssub.s32 %s35, %s42
      %s49 = sor.u32 %s47, %s48
      %p50 = scmp.eq.s32.totalorder %s49, 0
      %s52 = sadd.s32 %s51, 1
      %s53 = scalar_select %p50, %s51, %s52
      %p56 = pneg %p50
      %p57 = scmp.eq.s32.totalorder %s27, 1
      %p58 = por %p56, %p57
      %p59 = scmp.ne.s32.totalorder %s51, %s54
      %p60 = scmp.eq.s32.totalorder %s27, 0
      %p61 = por %p59, %p60
      %p62 = scmp.ne.s32.totalorder %s51, %s54
      %p63 = scmp.eq.s32.totalorder %s32, 1
      %p64 = por %p62, %p63
      %p65 = scmp.ne.s32.totalorder %s54, %s55
      %p66 = scmp.eq.s32.totalorder %s32, 0
      %p67 = por %p65, %p66
      %p68 = scmp.ne.s32.totalorder %s54, %s55
      %p69 = scmp.eq.s32.totalorder %s33, 1
      %p70 = por %p68, %p69
      %p72 = scmp.ne.s32.totalorder %s55, %s71
      %p73 = scmp.eq.s32.totalorder %s33, 0
      %p74 = por %p72, %p73
      %s76 = sadd.s32 %s75, 1
      %p79 = scmp.eq.s32.totalorder %s27, 1
      %p80 = scmp.ne.s32.totalorder %s75, %s77
      %p81 = scmp.eq.s32.totalorder %s27, 0
      %p82 = por %p80, %p81
      %p83 = scmp.ne.s32.totalorder %s75, %s77
      %p84 = scmp.eq.s32.totalorder %s32, 1
      %p85 = por %p83, %p84
      %p86 = scmp.ne.s32.totalorder %s77, %s78
      %p87 = scmp.eq.s32.totalorder %s32, 0
      %p88 = por %p86, %p87
      %p89 = scmp.ne.s32.totalorder %s77, %s78
      %p90 = scmp.eq.s32.totalorder %s33, 1
      %p91 = por %p89, %p90
      %p93 = scmp.ne.s32.totalorder %s78, %s92
      %p94 = scmp.eq.s32.totalorder %s33, 0
      %p95 = por %p93, %p94
      %s97 = sadd.s32 %s96, 1
      %p100 = scmp.eq.s32.totalorder %s27, 1
      %p101 = scmp.ne.s32.totalorder %s96, %s98
      %p102 = scmp.eq.s32.totalorder %s27, 0
      %p103 = por %p101, %p102
      %p104 = scmp.ne.s32.totalorder %s96, %s98
      %p105 = scmp.eq.s32.totalorder %s32, 1
      %p106 = por %p104, %p105
      %p107 = scmp.ne.s32.totalorder %s98, %s99
      %p108 = scmp.eq.s32.totalorder %s32, 0
      %p109 = por %p107, %p108
      %p110 = scmp.ne.s32.totalorder %s98, %s99
      %p111 = scmp.eq.s32.totalorder %s33, 1
      %p112 = por %p110, %p111
      %p114 = scmp.ne.s32.totalorder %s99, %s113
      %p115 = scmp.eq.s32.totalorder %s33, 0
      %p116 = por %p114, %p115
      %s118 = sadd.s32 %s117, 1
      %p121 = scmp.eq.s32.totalorder %s27, 1
      %p122 = scmp.ne.s32.totalorder %s117, %s119
      %p123 = scmp.eq.s32.totalorder %s27, 0
      %p124 = por %p122, %p123
      %p125 = scmp.ne.s32.totalorder %s117, %s119
      %p126 = scmp.eq.s32.totalorder %s32, 1
      %p127 = por %p125, %p126
      %p128 = scmp.ne.s32.totalorder %s119, %s120
      %p129 = scmp.eq.s32.totalorder %s32, 0
      %p130 = por %p128, %p129
      %p131 = scmp.ne.s32.totalorder %s119, %s120
      %p132 = scmp.eq.s32.totalorder %s33, 1
      %p133 = por %p131, %p132
      %p135 = scmp.ne.s32.totalorder %s120, %s134
      %p136 = scmp.eq.s32.totalorder %s33, 0
      %p137 = por %p135, %p136
      %s139 = sadd.s32 %s138, 1
      %p142 = scmp.eq.s32.totalorder %s27, 1
      %p143 = scmp.ne.s32.totalorder %s138, %s140
      %p144 = scmp.eq.s32.totalorder %s27, 0
      %p145 = por %p143, %p144
      %p146 = scmp.ne.s32.totalorder %s138, %s140
      %p147 = scmp.eq.s32.totalorder %s32, 1
      %p148 = por %p146, %p147
      %p149 = scmp.ne.s32.totalorder %s140, %s141
      %p150 = scmp.eq.s32.totalorder %s32, 0
      %p151 = por %p149, %p150
      %p152 = scmp.ne.s32.totalorder %s140, %s141
      %p153 = scmp.eq.s32.totalorder %s33, 1
      %p154 = por %p152, %p153
      %p156 = scmp.ne.s32.totalorder %s141, %s155
      %p157 = scmp.eq.s32.totalorder %s33, 0
      %p158 = por %p156, %p157
      %s160 = sadd.s32 %s159, 1
      %p163 = scmp.eq.s32.totalorder %s27, 1
      %p164 = scmp.ne.s32.totalorder %s159, %s161
      %p165 = scmp.eq.s32.totalorder %s27, 0
      %p166 = por %p164, %p165
      %p167 = scmp.ne.s32.totalorder %s159, %s161
      %p168 = scmp.eq.s32.totalorder %s32, 1
      %p169 = por %p167, %p168
      %p170 = scmp.ne.s32.totalorder %s161, %s162
      %p171 = scmp.eq.s32.totalorder %s32, 0
      %p172 = por %p170, %p171
      %p173 = scmp.ne.s32.totalorder %s161, %s162
      %p174 = scmp.eq.s32.totalorder %s33, 1
      %p175 = por %p173, %p174
      %p177 = scmp.ne.s32.totalorder %s162, %s176
      %p178 = scmp.eq.s32.totalorder %s33, 0
      %p179 = por %p177, %p178
      %s181 = sadd.s32 %s180, 1
      %p184 = scmp.eq.s32.totalorder %s27, 1
      %p185 = scmp.ne.s32.totalorder %s180, %s182
      %p186 = scmp.eq.s32.totalorder %s27, 0
      %p187 = por %p185, %p186
      %p188 = scmp.ne.s32.totalorder %s180, %s182
      %p189 = scmp.eq.s32.totalorder %s32, 1
      %p190 = por %p188, %p189
      %p191 = scmp.ne.s32.totalorder %s182, %s183
      %p192 = scmp.eq.s32.totalorder %s32, 0
      %p193 = por %p191, %p192
      %p194 = scmp.ne.s32.totalorder %s182, %s183
      %p195 = scmp.eq.s32.totalorder %s33, 1
      %p196 = por %p194, %p195
      %p198 = scmp.ne.s32.totalorder %s183, %s197
      %p199 = scmp.eq.s32.totalorder %s33, 0
      %p200 = por %p198, %p199
      %s201 = ssub.s32 %s34, %s46
      %s202 = ssub.s32 %s35, %s42
      %s203 = sor.u32 %s201, %s202
      %p204 = scmp.eq.s32.totalorder %s203, 0
      %s206 = sadd.s32 %s205, 1
      %s207 = scalar_select %p204, %s205, %s206
      %p210 = pneg %p204
      %p211 = scmp.eq.s32.totalorder %s27, 1
      %p212 = por %p210, %p211
      %p213 = scmp.ne.s32.totalorder %s205, %s208
      %p214 = scmp.eq.s32.totalorder %s27, 0
      %p215 = por %p213, %p214
      %p216 = scmp.ne.s32.totalorder %s205, %s208
      %p217 = scmp.eq.s32.totalorder %s32, 1
      %p218 = por %p216, %p217
      %p219 = scmp.ne.s32.totalorder %s208, %s209
      %p220 = scmp.eq.s32.totalorder %s32, 0
      %p221 = por %p219, %p220
      %p222 = scmp.ne.s32.totalorder %s208, %s209
      %p223 = scmp.eq.s32.totalorder %s33, 1
      %p224 = por %p222, %p223
      %p226 = scmp.ne.s32.totalorder %s209, %s225
      %p227 = scmp.eq.s32.totalorder %s33, 0
      %p228 = por %p226, %p227
      %s229 = ssub.s32 %s34, %s46
      %s230 = ssub.s32 %s35, %s42
      %s231 = sor.u32 %s229, %s230
      %p232 = scmp.eq.s32.totalorder %s231, 0
      %s234 = sadd.s32 %s233, 1
      %s235 = scalar_select %p232, %s233, %s234
      %p238 = pneg %p232
      %p239 = scmp.eq.s32.totalorder %s27, 1
      %p240 = por %p238, %p239
      %p241 = scmp.ne.s32.totalorder %s233, %s236
      %p242 = scmp.eq.s32.totalorder %s27, 0
      %p243 = por %p241, %p242
      %p244 = scmp.ne.s32.totalorder %s233, %s236
      %p245 = scmp.eq.s32.totalorder %s32, 1
      %p246 = por %p244, %p245
      %p247 = scmp.ne.s32.totalorder %s236, %s237
      %p248 = scmp.eq.s32.totalorder %s32, 0
      %p249 = por %p247, %p248
      %p250 = scmp.ne.s32.totalorder %s236, %s237
      %p251 = scmp.eq.s32.totalorder %s33, 1
      %p252 = por %p250, %p251
      %p254 = scmp.ne.s32.totalorder %s237, %s253
      %p255 = scmp.eq.s32.totalorder %s33, 0
      %p256 = por %p254, %p255
      %s257 = ssub.s32 %s34, %s46
      %s258 = ssub.s32 %s35, %s42
      %s259 = sor.u32 %s257, %s258
      %p260 = scmp.eq.s32.totalorder %s259, 0
      %s262 = sadd.s32 %s261, 1
      %s263 = scalar_select %p260, %s261, %s262
      %p266 = pneg %p260
      %p267 = scmp.eq.s32.totalorder %s27, 1
      %p268 = por %p266, %p267
      %p269 = scmp.ne.s32.totalorder %s261, %s264
      %p270 = scmp.eq.s32.totalorder %s27, 0
      %p271 = por %p269, %p270
      %p272 = scmp.ne.s32.totalorder %s261, %s264
      %p273 = scmp.eq.s32.totalorder %s32, 1
      %p274 = por %p272, %p273
      %p275 = scmp.ne.s32.totalorder %s264, %s265
      %p276 = scmp.eq.s32.totalorder %s32, 0
      %p277 = por %p275, %p276
      %p278 = scmp.ne.s32.totalorder %s264, %s265
      %p279 = scmp.eq.s32.totalorder %s33, 1
      %p280 = por %p278, %p279
      %p282 = scmp.ne.s32.totalorder %s265, %s281
      %p283 = scmp.eq.s32.totalorder %s33, 0
      %p284 = por %p282, %p283
      %p285 = scmp.le.s32.totalorder 1, %s27
      %p286 = scmp.lt.s32.totalorder %s27, 3
      %p287 = pnand %p285, %p286
      %p288 = pneg %p287
      // Predicated region
      $region9: #{tpu_custom_call.1} parent=5 // pred_check
        _
      $region10: #{tpu_custom_call.1} parent=5 // pred_check_branch
        %290 = sbr.rel (%p287) target = $region12
      $region11: #{tpu_custom_call.1} parent=5 // pred_region
        %s291 = ssub.s32 %s27, 1
        // Predicated region
        $region13: #{tpu_custom_call.1} parent=11 // pred_check
          %p292 = pneg %p88
        $region14: #{tpu_custom_call.1} parent=11 // pred_check_branch
          %294 = sbr.rel (%p292) target = $region16
        $region15: #{tpu_custom_call.1} parent=11 // pred_region
          %296 = vsyncadd [#allocation6], 0
          %s297 = sshll.u32 %s1, 4
          %s298 = int_to_ptr.hbm [resolvable:$true] %s297
          %s299 = sshll.u32 [#allocation5], 4
          %s300 = int_to_ptr.vmem [resolvable:$true] %s299
          %305 = dma.hbm_to_vmem [thread:$0]  %s298, 512, %s300, [#allocation6], 128, 128, 8
        $region16: #{tpu_custom_call.1} parent=11 // pred_fallthru
          _
        // Predicated region
        $region17: #{tpu_custom_call.1} parent=11 // pred_check
          %p306 = pneg %p109
        $region18: #{tpu_custom_call.1} parent=11 // pred_check_branch
          %308 = sbr.rel (%p306) target = $region20
        $region19: #{tpu_custom_call.1} parent=11 // pred_region
          _
        $region20: #{tpu_custom_call.1} parent=11 // pred_fallthru
          _
        // Predicated region
        $region21: #{tpu_custom_call.1} parent=11 // pred_check
          %p309 = pneg %p130
        $region22: #{tpu_custom_call.1} parent=11 // pred_check_branch
          %311 = sbr.rel (%p309) target = $region24
        $region23: #{tpu_custom_call.1} parent=11 // pred_region
          %313 = vsyncadd [#allocation6], 0
          %s314 = sshll.u32 %s3, 4
          %s315 = int_to_ptr.hbm [resolvable:$true] %s314
          %s316 = sshll.u32 [#allocation7], 4
          %s317 = int_to_ptr.vmem [resolvable:$true] %s316
          %322 = dma.hbm_to_vmem [thread:$0]  %s315, 512, %s317, [#allocation6], 128, 128, 8
        $region24: #{tpu_custom_call.1} parent=11 // pred_fallthru
          _
        // Predicated region
        $region25: #{tpu_custom_call.1} parent=11 // pred_check
          %p323 = pneg %p151
        $region26: #{tpu_custom_call.1} parent=11 // pred_check_branch
          %325 = sbr.rel (%p323) target = $region28
        $region27: #{tpu_custom_call.1} parent=11 // pred_region
          _
        $region28: #{tpu_custom_call.1} parent=11 // pred_fallthru
          _
        // Predicated region
        $region29: #{tpu_custom_call.1} parent=11 // pred_check
          %p326 = pneg %p172
        $region30: #{tpu_custom_call.1} parent=11 // pred_check_branch
          %328 = sbr.rel (%p326) target = $region32
        $region31: #{tpu_custom_call.1} parent=11 // pred_region
          %330 = vsyncadd [#allocation9], 0
          %s331 = sshll.u32 %s5, 4
          %s332 = int_to_ptr.hbm [resolvable:$true] %s331
          %s333 = sshll.u32 [#allocation8], 4
          %s334 = int_to_ptr.vmem [resolvable:$true] %s333
          %339 = dma.hbm_to_vmem [thread:$0]  %s332, 512, %s334, [#allocation9], 128, 128, 8
        $region32: #{tpu_custom_call.1} parent=11 // pred_fallthru
          _
        // Predicated region
        $region33: #{tpu_custom_call.1} parent=11 // pred_check
          %p340 = pneg %p193
        $region34: #{tpu_custom_call.1} parent=11 // pred_check_branch
          %342 = sbr.rel (%p340) target = $region36
        $region35: #{tpu_custom_call.1} parent=11 // pred_region
          _
        $region36: #{tpu_custom_call.1} parent=11 // pred_fallthru
          _
      $region12: #{tpu_custom_call.1} parent=5 // pred_fallthru
        _
      %p343 = scmp.lt.s32.totalorder %s27, 2
      // Predicated region
      $region37: #{tpu_custom_call.1} parent=5 // pred_check
        %p344 = pneg %p343
      $region38: #{tpu_custom_call.1} parent=5 // pred_check_branch
        %346 = sbr.rel (%p344) target = $region40
      $region39: #{tpu_custom_call.1} parent=5 // pred_region
        // Predicated region
        $region41: #{tpu_custom_call.1} parent=39 // pred_check
          %p347 = pneg %p61
        $region42: #{tpu_custom_call.1} parent=39 // pred_check_branch
          %349 = sbr.rel (%p347) target = $region44
        $region43: #{tpu_custom_call.1} parent=39 // pred_region
          %s350 = sand.u32 %s51, 1
          %s351 = scalar_lea.sflag [#allocation3], %s350
          %s352 = sand.u32 %s51, 1
          %s353 = smul.addr %s352, 8
          %s354 = scalar_lea.vmem [#allocation2], %s353
          %356 = vsyncadd %s351, 0
          %s357 = sadd.s32 %s35, %s34
          %s358 = smul.addr %s357, 8
          %s359 = scalar_lea.hbm %s0, %s358
          %s361 = sshll.u32 %s359, 4
          %s362 = int_to_ptr.hbm [resolvable:$true] %s361
          %s363 = sshll.u32 %s354, 4
          %s364 = int_to_ptr.vmem [resolvable:$true] %s363
          %366 = dma.hbm_to_vmem [thread:$0]  %s362, 128, %s364, %s351
        $region44: #{tpu_custom_call.1} parent=39 // pred_fallthru
          _
      $region40: #{tpu_custom_call.1} parent=5 // pred_fallthru
        _
      %p367 = scmp.le.s32.totalorder 1, %s27
      %p368 = scmp.lt.s32.totalorder %s27, 3
      %p369 = pnand %p367, %p368
      %p370 = pneg %p369
      // Predicated region
      $region45: #{tpu_custom_call.1} parent=5 // pred_check
        _
      $region46: #{tpu_custom_call.1} parent=5 // pred_check_branch
        %372 = sbr.rel (%p369) target = $region48
      $region47: #{tpu_custom_call.1} parent=5 // pred_region
        %s373 = ssub.s32 %s27, 1
        %s374 = sand.u32 %s54, 1
        %s375 = scalar_lea.sflag [#allocation3], %s374
        %s376 = sand.u32 %s54, 1
        %s377 = smul.addr %s376, 8
        %s378 = scalar_lea.vmem [#allocation2], %s377
        // Predicated region
        $region49: #{tpu_custom_call.1} parent=47 // pred_check
          %p379 = pneg %p67
        $region50: #{tpu_custom_call.1} parent=47 // pred_check_branch
          %381 = sbr.rel (%p379) target = $region52
        $region51: #{tpu_custom_call.1} parent=47 // pred_region
          %383 = dma.done %s375, 128
        $region52: #{tpu_custom_call.1} parent=47 // pred_fallthru
          _
        // Predicated region
        $region53: #{tpu_custom_call.1} parent=47 // pred_check
          %p384 = pneg %p88
        $region54: #{tpu_custom_call.1} parent=47 // pred_check_branch
          %386 = sbr.rel (%p384) target = $region56
        $region55: #{tpu_custom_call.1} parent=47 // pred_region
          %388 = dma.done [#allocation6], 512
        $region56: #{tpu_custom_call.1} parent=47 // pred_fallthru
          _
        // Predicated region
        $region57: #{tpu_custom_call.1} parent=47 // pred_check
          %p389 = pneg %p130
        $region58: #{tpu_custom_call.1} parent=47 // pred_check_branch
          %391 = sbr.rel (%p389) target = $region60
        $region59: #{tpu_custom_call.1} parent=47 // pred_region
          %393 = dma.done [#allocation6], 512
        $region60: #{tpu_custom_call.1} parent=47 // pred_fallthru
          _
        // Predicated region
        $region61: #{tpu_custom_call.1} parent=47 // pred_check
          %p394 = pneg %p172
        $region62: #{tpu_custom_call.1} parent=47 // pred_check_branch
          %396 = sbr.rel (%p394) target = $region64
        $region63: #{tpu_custom_call.1} parent=47 // pred_region
          %398 = dma.done [#allocation9], 512
        $region64: #{tpu_custom_call.1} parent=47 // pred_fallthru
          _
        %s399 = sand.u32 %s54, 1
        %s400 = scalar_lea.sflag [#allocation3], %s399
        %s401 = sand.u32 %s54, 1
        %s402 = smul.addr %s401, 8
        %s403 = scalar_lea.vmem [#allocation2], %s402
        %p404 = pneg %p67
        %p405 = pneg %p64
        %p406 = pneg %p88
        %p407 = pneg %p85
        %p408 = pneg %p109
        %p409 = pneg %p106
        %p410 = pneg %p130
        %p411 = pneg %p127
        %p412 = pneg %p151
        %p413 = pneg %p148
        %p414 = pneg %p172
        %p415 = pneg %p169
        %p416 = pneg %p193
        %p417 = pneg %p190
        %p418 = pneg %p221
        %p419 = pneg %p218
        %s420 = sand.u32 %s208, 1
        %s421 = scalar_lea.sflag [#allocation4], %s420
        %s422 = sand.u32 %s208, 1
        %s423 = smul.addr %s422, 16
        %s424 = scalar_lea.vmem [#allocation10], %s423
        %p425 = pneg %p249
        %p426 = pneg %p246
        %s427 = sand.u32 %s32, 1
        %s428 = scalar_lea.sflag [#allocation12], %s427
        %s429 = sand.u32 %s236, 1
        %s430 = smul.addr %s429, 16
        %s431 = scalar_lea.vmem [#allocation11], %s430
        %p432 = pneg %p277
        %p433 = pneg %p274
        %s434 = sand.u32 %s32, 1
        %s435 = scalar_lea.sflag [#allocation12], %s434
        %s436 = sand.u32 %s264, 1
        %s437 = smul.addr %s436, 16
        %s438 = scalar_lea.vmem [#allocation13], %s437
        %v439 = vld [vmem:[%s378] sm:$0xff]
        %v440 = vld [vmem:[#allocation5] sm:$0xff]
        %v441 = vld [vmem:[#allocation5 + $0x8] sm:$0xff]
        %v442 = vld [vmem:[#allocation5 + $0x10] sm:$0xff]
        %v443 = vld [vmem:[#allocation5 + $0x18] sm:$0xff]
        %v444 = vld [vmem:[%s2] sm:$0x1]
        %v446 = vperm.slane %v444, 0
        %vm448 = vcmask 261120
        %v450 = vsel %vm448, %v439, 0
        %452 = vmatpush.msra.mxu0 0.0
        %453 = vmatpush.msra.mxu0 0.0
        %454 = vmatpush.msra.mxu0 0.0
        %455 = vmatpush.msra.mxu0 0.0
        %456 = vmatpush.msra.mxu0 0.0
        %457 = vmatpush.msra.mxu0 0.0
        %458 = vmatpush.msra.mxu0 0.0
        %459 = vmatpush.msra.mxu0 0.0
        %460 = vmatpush.msra.mxu0 0.0
        %461 = vmatpush.msra.mxu0 0.0
        %462 = vmatpush.msra.mxu0 0.0
        %463 = vmatpush.msra.mxu0 0.0
        %464 = vmatpush.msra.mxu0 %v443
        %465 = vmatpush.msra.mxu0 %v442
        %466 = vmatpush.msra.mxu0 %v441
        %467 = vmatpush.msra.mxu0 %v440
        %468 = vmatmul.f32.gmra.mxu0 %v450
        %v469 = vpop.f32.mrf.mxu0
        %v470 = vadd.f32 %v446, %v469
        %471 = vdwg.mxu0
        %v472 = vld [vmem:[#allocation7] sm:$0xff]
        %v473 = vld [vmem:[#allocation7 + $0x8] sm:$0xff]
        %v474 = vld [vmem:[#allocation7 + $0x10] sm:$0xff]
        %v475 = vld [vmem:[#allocation7 + $0x18] sm:$0xff]
        %v476 = vld [vmem:[%s4] sm:$0x1]
        %v478 = vperm.slane %v476, 0
        %480 = vmatpush.msra.mxu0 0.0
        %481 = vmatpush.msra.mxu0 0.0
        %482 = vmatpush.msra.mxu0 0.0
        %483 = vmatpush.msra.mxu0 0.0
        %484 = vmatpush.msra.mxu0 0.0
        %485 = vmatpush.msra.mxu0 0.0
        %486 = vmatpush.msra.mxu0 0.0
        %487 = vmatpush.msra.mxu0 0.0
        %488 = vmatpush.msra.mxu0 0.0
        %489 = vmatpush.msra.mxu0 0.0
        %490 = vmatpush.msra.mxu0 0.0
        %491 = vmatpush.msra.mxu0 0.0
        %492 = vmatpush.msra.mxu0 %v475
        %493 = vmatpush.msra.mxu0 %v474
        %494 = vmatpush.msra.mxu0 %v473
        %495 = vmatpush.msra.mxu0 %v472
        %496 = vmatmul.f32.gmra.mxu0 %v450
        %v497 = vpop.f32.mrf.mxu0
        %v498 = vadd.f32 %v478, %v497
        %499 = vdwg.mxu0
        %v500 = vld [vmem:[#allocation8] sm:$0xff]
        %v501 = vld [vmem:[#allocation8 + $0x8] sm:$0xff]
        %v502 = vld [vmem:[#allocation8 + $0x10] sm:$0xff]
        %v503 = vld [vmem:[#allocation8 + $0x18] sm:$0xff]
        %v504 = vld [vmem:[%s6] sm:$0x1]
        %v506 = vperm.slane %v504, 0
        %508 = vmatpush.msra.mxu0 0.0
        %509 = vmatpush.msra.mxu0 0.0
        %510 = vmatpush.msra.mxu0 0.0
        %511 = vmatpush.msra.mxu0 0.0
        %512 = vmatpush.msra.mxu0 0.0
        %513 = vmatpush.msra.mxu0 0.0
        %514 = vmatpush.msra.mxu0 0.0
        %515 = vmatpush.msra.mxu0 0.0
        %516 = vmatpush.msra.mxu0 0.0
        %517 = vmatpush.msra.mxu0 0.0
        %518 = vmatpush.msra.mxu0 0.0
        %519 = vmatpush.msra.mxu0 0.0
        %520 = vmatpush.msra.mxu0 %v503
        %521 = vmatpush.msra.mxu0 %v502
        %522 = vmatpush.msra.mxu0 %v501
        %523 = vmatpush.msra.mxu0 %v500
        %524 = vmatmul.f32.gmra.mxu0 %v450
        %v525 = vpop.f32.mrf.mxu0
        %v526 = vadd.f32 %v506, %v525
        %527 = vdwg.mxu0
        %vm528 = vcmask 130048
        %529 = vst.msk [vmem:[%s424] sm:$0xff] %vm528, %v470
        %530 = vst.msk [vmem:[%s431] sm:$0xff] %vm528, %v498
        %531 = vst.msk [vmem:[%s438] sm:$0xff] %vm528, %v526
        %533 = vrot.lane.b32.xlu0 %v470, 112
        %v534 = vpop.permute.xlu0 %533
        %s536 = scalar_lea.vmem %s424, 8 [#allocation10]
        %537 = vst.msk [vmem:[%s536] sm:$0xff] %vm528, %v534
        %539 = vrot.lane.b32.xlu0 %v498, 112
        %v540 = vpop.permute.xlu0 %539
        %s542 = scalar_lea.vmem %s431, 8 [#allocation11]
        %543 = vst.msk [vmem:[%s542] sm:$0xff] %vm528, %v540
        %545 = vrot.lane.b32.xlu0 %v526, 112
        %v546 = vpop.permute.xlu0 %545
        %s548 = scalar_lea.vmem %s438, 8 [#allocation13]
        %549 = vst.msk [vmem:[%s548] sm:$0xff] %vm528, %v546
        %s550 = sand.u32 %s208, 1
        %s551 = scalar_lea.sflag [#allocation4], %s550
        %s552 = sand.u32 %s208, 1
        %s553 = smul.addr %s552, 16
        %s554 = scalar_lea.vmem [#allocation10], %s553
        %s555 = sand.u32 %s32, 1
        %s556 = scalar_lea.sflag [#allocation12], %s555
        %s557 = sand.u32 %s236, 1
        %s558 = smul.addr %s557, 16
        %s559 = scalar_lea.vmem [#allocation11], %s558
        %s560 = sand.u32 %s32, 1
        %s561 = scalar_lea.sflag [#allocation12], %s560
        %s562 = sand.u32 %s264, 1
        %s563 = smul.addr %s562, 16
        %s564 = scalar_lea.vmem [#allocation13], %s563
        // Predicated region
        $region65: #{tpu_custom_call.1} parent=47 // pred_check
          %p565 = pneg %p218
        $region66: #{tpu_custom_call.1} parent=47 // pred_check_branch
          %567 = sbr.rel (%p565) target = $region68
        $region67: #{tpu_custom_call.1} parent=47 // pred_region
          %569 = vsyncadd %s551, 0
          %s570 = smul.addr %s36, 2
          %s571 = sadd.s32 %s37, %s570
          %s572 = smul.addr %s571, 8
          %s573 = scalar_lea.hbm %s7, %s572
          %s574 = sshll.u32 %s554, 4
          %s575 = int_to_ptr.vmem [resolvable:$true] %s574
          %s576 = sshll.u32 %s573, 4
          %s577 = int_to_ptr.hbm [resolvable:$true] %s576
          %582 = dma.vmem_to_hbm [thread:$0]  %s575, 256, %s577, %s551, 128, 128, 8
        $region68: #{tpu_custom_call.1} parent=47 // pred_fallthru
          _
        // Predicated region
        $region69: #{tpu_custom_call.1} parent=47 // pred_check
          %p583 = pneg %p246
        $region70: #{tpu_custom_call.1} parent=47 // pred_check_branch
          %585 = sbr.rel (%p583) target = $region72
        $region71: #{tpu_custom_call.1} parent=47 // pred_region
          %587 = vsyncadd %s556, 0
          %s588 = smul.addr %s36, 2
          %s589 = sadd.s32 %s37, %s588
          %s590 = smul.addr %s589, 8
          %s591 = scalar_lea.hbm %s8, %s590
          %s592 = sshll.u32 %s559, 4
          %s593 = int_to_ptr.vmem [resolvable:$true] %s592
          %s594 = sshll.u32 %s591, 4
          %s595 = int_to_ptr.hbm [resolvable:$true] %s594
          %600 = dma.vmem_to_hbm [thread:$0]  %s593, 256, %s595, %s556, 128, 128, 8
        $region72: #{tpu_custom_call.1} parent=47 // pred_fallthru
          _
        // Predicated region
        $region73: #{tpu_custom_call.1} parent=47 // pred_check
          %p601 = pneg %p274
        $region74: #{tpu_custom_call.1} parent=47 // pred_check_branch
          %603 = sbr.rel (%p601) target = $region76
        $region75: #{tpu_custom_call.1} parent=47 // pred_region
          %605 = vsyncadd %s561, 0
          %s606 = smul.addr %s36, 2
          %s607 = sadd.s32 %s37, %s606
          %s608 = smul.addr %s607, 8
          %s609 = scalar_lea.hbm %s9, %s608
          %s610 = sshll.u32 %s564, 4
          %s611 = int_to_ptr.vmem [resolvable:$true] %s610
          %s612 = sshll.u32 %s609, 4
          %s613 = int_to_ptr.hbm [resolvable:$true] %s612
          %618 = dma.vmem_to_hbm [thread:$0]  %s611, 256, %s613, %s561, 128, 128, 8
        $region76: #{tpu_custom_call.1} parent=47 // pred_fallthru
          _
      $region48: #{tpu_custom_call.1} parent=5 // pred_fallthru
        _
      %p619 = scmp.le.s32.totalorder 2, %s27
      // Predicated region
      $region77: #{tpu_custom_call.1} parent=5 // pred_check
        %p620 = pneg %p619
      $region78: #{tpu_custom_call.1} parent=5 // pred_check_branch
        %622 = sbr.rel (%p620) target = $region80
      $region79: #{tpu_custom_call.1} parent=5 // pred_region
        %s623 = ssub.s32 %s27, 2
        // Predicated region
        $region81: #{tpu_custom_call.1} parent=79 // pred_check
          %p624 = pneg %p224
        $region82: #{tpu_custom_call.1} parent=79 // pred_check_branch
          %626 = sbr.rel (%p624) target = $region84
        $region83: #{tpu_custom_call.1} parent=79 // pred_region
          %s627 = sand.u32 %s209, 1
          %s628 = scalar_lea.sflag [#allocation4], %s627
          %s629 = sand.u32 %s209, 1
          %s630 = smul.addr %s629, 16
          %s631 = scalar_lea.vmem [#allocation10], %s630
          %633 = dma.done %s628, 256
        $region84: #{tpu_custom_call.1} parent=79 // pred_fallthru
          _
        // Predicated region
        $region85: #{tpu_custom_call.1} parent=79 // pred_check
          %p634 = pneg %p252
        $region86: #{tpu_custom_call.1} parent=79 // pred_check_branch
          %636 = sbr.rel (%p634) target = $region88
        $region87: #{tpu_custom_call.1} parent=79 // pred_region
          %s637 = sand.u32 %s33, 1
          %s638 = scalar_lea.sflag [#allocation12], %s637
          %s639 = sand.u32 %s237, 1
          %s640 = smul.addr %s639, 16
          %s641 = scalar_lea.vmem [#allocation11], %s640
          %643 = dma.done %s638, 256
        $region88: #{tpu_custom_call.1} parent=79 // pred_fallthru
          _
        // Predicated region
        $region89: #{tpu_custom_call.1} parent=79 // pred_check
          %p644 = pneg %p280
        $region90: #{tpu_custom_call.1} parent=79 // pred_check_branch
          %646 = sbr.rel (%p644) target = $region92
        $region91: #{tpu_custom_call.1} parent=79 // pred_region
          %s647 = sand.u32 %s33, 1
          %s648 = scalar_lea.sflag [#allocation12], %s647
          %s649 = sand.u32 %s265, 1
          %s650 = smul.addr %s649, 16
          %s651 = scalar_lea.vmem [#allocation13], %s650
          %653 = dma.done %s648, 256
        $region92: #{tpu_custom_call.1} parent=79 // pred_fallthru
          _
      $region80: #{tpu_custom_call.1} parent=5 // pred_fallthru
        _
    $region6: #{tpu_custom_call.1} parent=1 // loop_footer
      %s31 = sadd.s32 1, %s27
    $region7: #{tpu_custom_call.1} parent=1 // loop_footer_branch
      %26 = sbr.rel target = $region3
    $region8: #{tpu_custom_call.1} parent=1 // loop_exit
      _
    %654 = vsyncpa [#allocation3], 1
    %s655 = scalar_lea.sflag [#allocation3], 1
    %656 = vsyncpa %s655, 1
    %657 = vsyncpa [#allocation6], 1
    %658 = vsyncpa [#allocation9], 1
    %659 = vsyncpa [#allocation4], 1
    %s660 = scalar_lea.sflag [#allocation4], 1
    %661 = vsyncpa %s660, 1
    %662 = vsyncpa [#allocation12], 1
    %s663 = scalar_lea.sflag [#allocation12], 1
    %664 = vsyncpa %s663, 1

</llo_original>
